<compile_context>
chip_gen: v7x
topology: tpu7x:2x2x1
jax: 0.10.0
libtpu: 0.0.40
codegen_flags: <defaults>
</compile_context>

<pallas_src>
import jax
import jax.numpy as jnp
import numpy as np
from jax.experimental import pallas as pl
from jax.experimental.pallas import tpu as pltpu

BN_EPS = 1e-5


def spm_kernel(x_ref, w1_ref, w2_ref, pk_ref, o_ref, acc_ref):
    # grid = (P problems ["parallel"], K tiles of D ["arbitrary"])
    k = pl.program_id(1)

    @pl.when(k == 0)
    def _():
        acc_ref[...] = jnp.zeros_like(acc_ref)

    # --- Linear(D, 256), partial contraction over this K-tile ---
    # (bias b1 omitted: cancelled by training-mode BN's mean subtraction)
    acc_ref[...] += jnp.dot(x_ref[...], w1_ref[...],
                            preferred_element_type=jnp.float32)

    @pl.when(k == pl.num_programs(1) - 1)
    def _():
        pk = pk_ref[...]                     # (6, H) packed per-feature vectors
        g1, be1 = pk[0:1, :], pk[1:2, :]
        g2, be2 = pk[2:3, :], pk[3:4, :]
        w3row = pk[4:5, :]                   # (1, H) = W3 @ ones(D)
        b3_sum = pk[5:6, 0:1]                # (1, 1) = sum(b3)

        h = acc_ref[...]                     # (B, H) f32
        inv_b = 1.0 / h.shape[0]

        # --- BatchNorm1d(256): one-pass stats, fused scale/shift, + ReLU ---
        mu = jnp.sum(h, axis=0, keepdims=True) * inv_b
        ex2 = jnp.sum(h * h, axis=0, keepdims=True) * inv_b
        var = jnp.maximum(ex2 - mu * mu, 0.0)
        scale = g1 * jax.lax.rsqrt(var + BN_EPS)
        shift = be1 - mu * scale
        h = jnp.maximum(h * scale + shift, 0.0)

        # --- Linear(256, 256); bias b2 omitted (cancelled by BN) ---
        h = jnp.dot(h.astype(jnp.bfloat16), w2_ref[...],
                    preferred_element_type=jnp.float32)

        # --- BatchNorm1d(256): one-pass stats, fused scale/shift, + ReLU ---
        mu = jnp.sum(h, axis=0, keepdims=True) * inv_b
        ex2 = jnp.sum(h * h, axis=0, keepdims=True) * inv_b
        var = jnp.maximum(ex2 - mu * mu, 0.0)
        scale = g2 * jax.lax.rsqrt(var + BN_EPS)
        shift = be2 - mu * scale
        h = jnp.maximum(h * scale + shift, 0.0)

        # --- Linear(256, D) + torch.sum(dim=1), folded:  h @ (W3 @ 1) + sum(b3) ---
        o_ref[...] = jnp.sum(h * w3row, axis=1, keepdims=True) + b3_sum


def _choose_tk(D):
    """K-tile for the first matmul: stream w1 in (tk, H) tiles when D is large;
    otherwise keep the full contraction in a single grid step."""
    for cand in (2048, 1024, 512):
        if D > cand and D % cand == 0:
            return cand
    return D


def _vmem_limit_bytes(B, D, H, tk):
    # Double-buffered streamed tiles (bf16 x / w1 K-tiles) + resident w2/pack/out
    # + accumulator and BN working tiles, plus slack for compiler scratch.
    tiles = 2 * (B * tk * 2 + tk * H * 2)
    resident = H * H * 2 + 8 * H * 4 + 2 * B * 4
    work = 4 * B * H * 4
    est = tiles + resident + work + (2 << 20)
    # Clamp well below v7x's 64 MiB physical VMEM (32 MiB scoped default).
    return int(min(max(est, 4 << 20), 40 << 20))


def _spm_pallas(xs, params):
    """xs: (P, B, D) -- P independent SpM problems (per-problem batch-stat BN),
    sharing the same weights. Returns (P, B)."""
    P, B, D = xs.shape
    H = params["w2"].shape[0]
    tk = _choose_tk(D)
    nk = D // tk

    # Fold Linear3 + sum(dim=1) outside the kernel (tiny, done in f32).
    w3_col = jnp.sum(params["w3"], axis=1)                     # (H,) = W3 @ ones(D)
    b3_sum = jnp.sum(params["b3"])                             # scalar
    # Pack all per-feature vectors into a single (6, H) input -> one DMA.
    pack = jnp.stack(
        [params["g1"], params["be1"], params["g2"], params["be2"],
         w3_col, jnp.full((H,), b3_sum, jnp.float32)], axis=0).astype(jnp.float32)

    grid_spec = pltpu.PrefetchScalarGridSpec(
        num_scalar_prefetch=0,
        grid=(P, nk),
        in_specs=[
            # x: bf16, streamed per (problem, K-tile)
            pl.BlockSpec((pl.Squeezed(), B, tk), lambda p, k: (p, 0, k)),
            # w1: bf16, streamed/pipelined over the K axis
            pl.BlockSpec((tk, H), lambda p, k: (k, 0)),
            # w2: bf16, resident across the grid
            pl.BlockSpec((H, H), lambda p, k: (0, 0)),
            # packed per-feature vectors: f32, resident
            pl.BlockSpec((6, H), lambda p, k: (0, 0)),
        ],
        out_specs=pl.BlockSpec((pl.Squeezed(), B, 1), lambda p, k: (p, 0, 0)),
        scratch_shapes=[pltpu.VMEM((B, H), jnp.float32)],
    )
    out = pl.pallas_call(
        spm_kernel,
        out_shape=jax.ShapeDtypeStruct((P, B, 1), jnp.float32),
        grid_spec=grid_spec,
        compiler_params=pltpu.CompilerParams(
            dimension_semantics=("parallel", "arbitrary"),
            vmem_limit_bytes=_vmem_limit_bytes(B, D, H, tk)),
    )(xs.astype(jnp.bfloat16), params["w1"], params["w2"], pack)
    return out[..., 0]                                          # (P, B)


def spm_forward(x, params):
    """Single SpM forward: x (B, D) -> (B,), matching torch.sum(dnn(x), dim=1)."""
    return _spm_pallas(x[None], params)[0]


def spm_forward_many(xs, params):
    """Many independent SpM problems (shared weights, per-problem BN stats) in
    one pallas_call: xs (P, B, D) -> (P, B). Amortizes fixed per-call overhead
    and shards the leading axis across TensorCores on v7x."""
    return _spm_pallas(xs, params)


def init_params(key, input_dim, hidden=256):
    """Mirror PyTorch defaults: Linear W,b ~ U(-1/sqrt(fan_in), ...); BN gamma=1, beta=0.
    w1/w2 are stored in bf16 (MXU path); w3/b3 stay f32 (folded on host side).
    b1/b2 exist only for the f32 reference -- they are dead in the fused kernel."""
    ks = jax.random.split(key, 6)

    def linear(kw, kb, fan_in, fan_out):
        bound = 1.0 / np.sqrt(fan_in)
        # Stored as (fan_in, fan_out) so the kernel does x @ W (== x @ W_torch.T).
        w = jax.random.uniform(kw, (fan_in, fan_out), jnp.float32, -bound, bound)
        b = jax.random.uniform(kb, (fan_out,), jnp.float32, -bound, bound)
        return w, b

    w1, b1 = linear(ks[0], ks[1], input_dim, hidden)
    w2, b2 = linear(ks[2], ks[3], hidden, hidden)
    w3, b3 = linear(ks[4], ks[5], hidden, input_dim)
    return dict(
        w1=w1.astype(jnp.bfloat16), b1=b1,
        g1=jnp.ones((hidden,), jnp.float32), be1=jnp.zeros((hidden,), jnp.float32),
        w2=w2.astype(jnp.bfloat16), b2=b2,
        g2=jnp.ones((hidden,), jnp.float32), be2=jnp.zeros((hidden,), jnp.float32),
        w3=w3, b3=b3,
    )


def spm_reference_matched(x, p):
    """Pure-JAX reference replicating the kernel math (bf16 x and matmuls,
    one-pass BN statistics, folded Linear3+sum)."""
    def bn(h, g, be):
        inv_b = 1.0 / h.shape[0]
        mu = jnp.sum(h, axis=0, keepdims=True) * inv_b
        ex2 = jnp.sum(h * h, axis=0, keepdims=True) * inv_b
        var = jnp.maximum(ex2 - mu * mu, 0.0)
        s = g * jax.lax.rsqrt(var + BN_EPS)
        return h * s + (be - mu * s)

    h = jnp.dot(x.astype(jnp.bfloat16), p["w1"], preferred_element_type=jnp.float32)
    h = jnp.maximum(bn(h, p["g1"], p["be1"]), 0.0)
    h = jnp.dot(h.astype(jnp.bfloat16), p["w2"], preferred_element_type=jnp.float32)
    h = jnp.maximum(bn(h, p["g2"], p["be2"]), 0.0)
    return h @ jnp.sum(p["w3"], axis=1) + jnp.sum(p["b3"])


def spm_reference_f32(x, p):
    """Full-precision PyTorch-equivalent forward (training-mode BN), INCLUDING the
    b1/b2 biases and two-pass variance -- confirms the cancellation/fold are exact."""
    def bn(h, g, be):
        mu = jnp.mean(h, axis=0, keepdims=True)
        var = jnp.mean((h - mu) ** 2, axis=0, keepdims=True)
        return (h - mu) * jax.lax.rsqrt(var + BN_EPS) * g + be

    h = x @ p["w1"].astype(jnp.float32) + p["b1"]
    h = jnp.maximum(bn(h, p["g1"], p["be1"]), 0.0)
    h = h @ p["w2"].astype(jnp.float32) + p["b2"]
    h = jnp.maximum(bn(h, p["g2"], p["be2"]), 0.0)
    y = h @ p["w3"] + p["b3"]
    return jnp.sum(y, axis=1)


if __name__ == "__main__":
    key = jax.random.PRNGKey(0)
    k1, k2, k3, k4 = jax.random.split(key, 4)

    # --- Case 1: toy shape (B=8, D=32) -> single K grid step. ---
    B, D = 8, 32
    x = jax.random.normal(k1, (B, D), jnp.float32)
    params = init_params(k2, D)
    out = jax.block_until_ready(jax.jit(spm_forward)(x, params))
    assert out.shape == (B,)
    np.testing.assert_allclose(np.asarray(out),
                               np.asarray(spm_reference_matched(x, params)),
                               rtol=1e-3, atol=1e-3)
    # Loose check vs. the full-f32 PyTorch-equivalent forward (with b1/b2):
    # differences come only from bf16 matmul inputs; the bias cancellation and
    # the Linear3+sum fold are mathematically exact.
    np.testing.assert_allclose(np.asarray(out),
                               np.asarray(spm_reference_f32(x, params)),
                               rtol=5e-2, atol=2e-1)

    # --- Case 2: larger D exercises the K-tiled, pipelined w1 path (2 steps). ---
    D2 = 1024
    x2 = jax.random.normal(k3, (B, D2), jnp.float32)
    params2 = init_params(k4, D2)
    out2 = jax.block_until_ready(jax.jit(spm_forward)(x2, params2))
    np.testing.assert_allclose(np.asarray(out2),
                               np.asarray(spm_reference_matched(x2, params2)),
                               rtol=1e-3, atol=1e-3)

    # --- Case 3: many independent problems in one pallas_call (parallel axis). ---
    P = 4
    xs = jax.random.normal(k3, (P, B, D), jnp.float32)
    outs = jax.block_until_ready(jax.jit(spm_forward_many)(xs, params))
    assert outs.shape == (P, B)
    ref = jnp.stack([spm_reference_matched(xs[i], params) for i in range(P)])
    np.testing.assert_allclose(np.asarray(outs), np.asarray(ref),
                               rtol=1e-3, atol=1e-3)

    print("KERNEL_OK")
</pallas_src>

<mosaic_0001>
module attributes {stable_mosaic.version = 11 : i64} {
  func.func @spm_kernel(%arg0: i32, %arg1: i32, %arg2: memref<1x8x32xbf16, #tpu.memory_space<vmem>>, %arg3: memref<32x256xbf16, #tpu.memory_space<vmem>>, %arg4: memref<256x256xbf16, #tpu.memory_space<vmem>>, %arg5: memref<6x256xf32, #tpu.memory_space<vmem>>, %arg6: memref<1x8x1xf32, #tpu.memory_space<vmem>>, %arg7: memref<8x256xf32, #tpu.memory_space<vmem>>) attributes {dimension_semantics = [#tpu.dimension_semantics<parallel>, #tpu.dimension_semantics<arbitrary>], iteration_bounds = array<i64: 1, 1>, scalar_prefetch = 0 : i64, scratch_operands = 1 : i64, tpu.core_type = #tpu.core_type<tc>, window_params = [{transform_indices = @transform_0, window_bounds = array<i64: 1, 8, 32>}, {transform_indices = @transform_1, window_bounds = array<i64: 32, 256>}, {pipeline_mode = #tpu.pipeline_mode<synchronous>, transform_indices = @transform_2, window_bounds = array<i64: 256, 256>}, {pipeline_mode = #tpu.pipeline_mode<synchronous>, transform_indices = @transform_3, window_bounds = array<i64: 6, 256>}, {transform_indices = @transform_4, window_bounds = array<i64: 1, 8, 1>}]} {
    %c0_i32 = arith.constant 0 : i32
    %0 = arith.cmpi eq, %arg1, %c0_i32 : i32
    %1 = arith.extui %0 : i1 to i32
    %c0_i32_0 = arith.constant 0 : i32
    %2 = arith.cmpi ne, %1, %c0_i32_0 : i32
    scf.if %2 {
      %cst_11 = arith.constant 0.000000e+00 : f32
      %13 = vector.broadcast %cst_11 : f32 to vector<8x256xf32>
      %c0_12 = arith.constant 0 : index
      %c0_13 = arith.constant 0 : index
      %14 = vector.load %arg7[%c0_12, %c0_13] : memref<8x256xf32, #tpu.memory_space<vmem>>, vector<8x256xf32>
      tpu.vector_store %arg7[%c0_12, %c0_13], %13 {strides = array<i32>} : memref<8x256xf32, #tpu.memory_space<vmem>>, vector<8x256xf32>,
    } else {
    }
    %c0 = arith.constant 0 : index
    %c0_1 = arith.constant 0 : index
    %3 = vector.load %arg7[%c0, %c0_1] : memref<8x256xf32, #tpu.memory_space<vmem>>, vector<8x256xf32>
    %c0_2 = arith.constant 0 : index
    %c0_3 = arith.constant 0 : index
    %c0_4 = arith.constant 0 : index
    %4 = vector.load %arg2[%c0_2, %c0_3, %c0_4] : memref<1x8x32xbf16, #tpu.memory_space<vmem>>, vector<1x8x32xbf16>
    %5 = vector.shape_cast %4 : vector<1x8x32xbf16> to vector<8x32xbf16>
    %c0_5 = arith.constant 0 : index
    %c0_6 = arith.constant 0 : index
    %6 = vector.load %arg3[%c0_5, %c0_6] : memref<32x256xbf16, #tpu.memory_space<vmem>>, vector<32x256xbf16>
    %cst = arith.constant dense<0.000000e+00> : vector<8x256xf32>
    %7 = tpu.matmul %5, %6, %cst {dimension_numbers = #tpu.dot_dimension_numbers<[1], [0], [0], [1], [0, 0, 1, 1], [], []>} : vector<8x32xbf16>, vector<32x256xbf16>, vector<8x256xf32> -> vector<8x256xf32>
    %8 = arith.addf %3, %7 : vector<8x256xf32>
    %c0_7 = arith.constant 0 : index
    %c0_8 = arith.constant 0 : index
    %9 = vector.load %arg7[%c0_7, %c0_8] : memref<8x256xf32, #tpu.memory_space<vmem>>, vector<8x256xf32>
    tpu.vector_store %arg7[%c0_7, %c0_8], %8 {strides = array<i32>} : memref<8x256xf32, #tpu.memory_space<vmem>>, vector<8x256xf32>,
    %c0_i32_9 = arith.constant 0 : i32
    %10 = arith.cmpi eq, %arg1, %c0_i32_9 : i32
    %11 = arith.extui %10 : i1 to i32
    %c0_i32_10 = arith.constant 0 : i32
    %12 = arith.cmpi ne, %11, %c0_i32_10 : i32
    scf.if %12 {
      %c0_11 = arith.constant 0 : index
      %c0_12 = arith.constant 0 : index
      %13 = vector.load %arg5[%c0_11, %c0_12] : memref<6x256xf32, #tpu.memory_space<vmem>>, vector<6x256xf32>
      %14 = vector.extract_strided_slice %13 {offsets = [0, 0], sizes = [1, 256], strides = [1, 1]} : vector<6x256xf32> to vector<1x256xf32>
      %15 = vector.extract_strided_slice %13 {offsets = [1, 0], sizes = [1, 256], strides = [1, 1]} : vector<6x256xf32> to vector<1x256xf32>
      %16 = vector.extract_strided_slice %13 {offsets = [2, 0], sizes = [1, 256], strides = [1, 1]} : vector<6x256xf32> to vector<1x256xf32>
      %17 = vector.extract_strided_slice %13 {offsets = [3, 0], sizes = [1, 256], strides = [1, 1]} : vector<6x256xf32> to vector<1x256xf32>
      %18 = vector.extract_strided_slice %13 {offsets = [4, 0], sizes = [1, 256], strides = [1, 1]} : vector<6x256xf32> to vector<1x256xf32>
      %19 = vector.extract_strided_slice %13 {offsets = [5, 0], sizes = [1, 1], strides = [1, 1]} : vector<6x256xf32> to vector<1x1xf32>
      %c0_13 = arith.constant 0 : index
      %c0_14 = arith.constant 0 : index
      %20 = vector.load %arg7[%c0_13, %c0_14] : memref<8x256xf32, #tpu.memory_space<vmem>>, vector<8x256xf32>
      %cst_15 = arith.constant dense<0.000000e+00> : vector<256xf32>
      %21 = vector.multi_reduction <add>, %20, %cst_15 [0] : vector<8x256xf32> to vector<256xf32>
      %22 = vector.shape_cast %21 : vector<256xf32> to vector<1x256xf32>
      %cst_16 = arith.constant 1.250000e-01 : f32
      %23 = vector.broadcast %cst_16 : f32 to vector<1x256xf32>
      %24 = arith.mulf %22, %23 : vector<1x256xf32>
      %25 = arith.mulf %20, %20 : vector<8x256xf32>
      %cst_17 = arith.constant dense<0.000000e+00> : vector<256xf32>
      %26 = vector.multi_reduction <add>, %25, %cst_17 [0] : vector<8x256xf32> to vector<256xf32>
      %27 = vector.shape_cast %26 : vector<256xf32> to vector<1x256xf32>
      %cst_18 = arith.constant 1.250000e-01 : f32
      %28 = vector.broadcast %cst_18 : f32 to vector<1x256xf32>
      %29 = arith.mulf %27, %28 : vector<1x256xf32>
      %30 = arith.mulf %24, %24 : vector<1x256xf32>
      %31 = arith.subf %29, %30 : vector<1x256xf32>
      %cst_19 = arith.constant 0.000000e+00 : f32
      %32 = vector.broadcast %cst_19 : f32 to vector<1x256xf32>
      %33 = arith.maximumf %31, %32 : vector<1x256xf32>
      %cst_20 = arith.constant 9.99999974E-6 : f32
      %34 = vector.broadcast %cst_20 : f32 to vector<1x256xf32>
      %35 = arith.addf %33, %34 : vector<1x256xf32>
      %36 = math.rsqrt %35 : vector<1x256xf32>
      %37 = arith.mulf %14, %36 : vector<1x256xf32>
      %38 = arith.mulf %24, %37 : vector<1x256xf32>
      %39 = arith.subf %15, %38 : vector<1x256xf32>
      %40 = vector.broadcast %37 : vector<1x256xf32> to vector<8x256xf32>
      %41 = arith.mulf %20, %40 : vector<8x256xf32>
      %42 = vector.broadcast %39 : vector<1x256xf32> to vector<8x256xf32>
      %43 = arith.addf %41, %42 : vector<8x256xf32>
      %cst_21 = arith.constant 0.000000e+00 : f32
      %44 = vector.broadcast %cst_21 : f32 to vector<8x256xf32>
      %45 = arith.maximumf %43, %44 : vector<8x256xf32>
      %46 = arith.truncf %45 : vector<8x256xf32> to vector<8x256xbf16>
      %c0_22 = arith.constant 0 : index
      %c0_23 = arith.constant 0 : index
      %47 = vector.load %arg4[%c0_22, %c0_23] : memref<256x256xbf16, #tpu.memory_space<vmem>>, vector<256x256xbf16>
      %cst_24 = arith.constant dense<0.000000e+00> : vector<8x256xf32>
      %48 = tpu.matmul %46, %47, %cst_24 {dimension_numbers = #tpu.dot_dimension_numbers<[1], [0], [0], [1], [0, 0, 1, 1], [], []>} : vector<8x256xbf16>, vector<256x256xbf16>, vector<8x256xf32> -> vector<8x256xf32>
      %cst_25 = arith.constant dense<0.000000e+00> : vector<256xf32>
      %49 = vector.multi_reduction <add>, %48, %cst_25 [0] : vector<8x256xf32> to vector<256xf32>
      %50 = vector.shape_cast %49 : vector<256xf32> to vector<1x256xf32>
      %cst_26 = arith.constant 1.250000e-01 : f32
      %51 = vector.broadcast %cst_26 : f32 to vector<1x256xf32>
      %52 = arith.mulf %50, %51 : vector<1x256xf32>
      %53 = arith.mulf %48, %48 : vector<8x256xf32>
      %cst_27 = arith.constant dense<0.000000e+00> : vector<256xf32>
      %54 = vector.multi_reduction <add>, %53, %cst_27 [0] : vector<8x256xf32> to vector<256xf32>
      %55 = vector.shape_cast %54 : vector<256xf32> to vector<1x256xf32>
      %cst_28 = arith.constant 1.250000e-01 : f32
      %56 = vector.broadcast %cst_28 : f32 to vector<1x256xf32>
      %57 = arith.mulf %55, %56 : vector<1x256xf32>
      %58 = arith.mulf %52, %52 : vector<1x256xf32>
      %59 = arith.subf %57, %58 : vector<1x256xf32>
      %cst_29 = arith.constant 0.000000e+00 : f32
      %60 = vector.broadcast %cst_29 : f32 to vector<1x256xf32>
      %61 = arith.maximumf %59, %60 : vector<1x256xf32>
      %cst_30 = arith.constant 9.99999974E-6 : f32
      %62 = vector.broadcast %cst_30 : f32 to vector<1x256xf32>
      %63 = arith.addf %61, %62 : vector<1x256xf32>
      %64 = math.rsqrt %63 : vector<1x256xf32>
      %65 = arith.mulf %16, %64 : vector<1x256xf32>
      %66 = arith.mulf %52, %65 : vector<1x256xf32>
      %67 = arith.subf %17, %66 : vector<1x256xf32>
      %68 = vector.broadcast %65 : vector<1x256xf32> to vector<8x256xf32>
      %69 = arith.mulf %48, %68 : vector<8x256xf32>
      %70 = vector.broadcast %67 : vector<1x256xf32> to vector<8x256xf32>
      %71 = arith.addf %69, %70 : vector<8x256xf32>
      %cst_31 = arith.constant 0.000000e+00 : f32
      %72 = vector.broadcast %cst_31 : f32 to vector<8x256xf32>
      %73 = arith.maximumf %71, %72 : vector<8x256xf32>
      %74 = vector.broadcast %18 : vector<1x256xf32> to vector<8x256xf32>
      %75 = arith.mulf %73, %74 : vector<8x256xf32>
      %cst_32 = arith.constant dense<0.000000e+00> : vector<8xf32>
      %76 = vector.multi_reduction <add>, %75, %cst_32 [1] : vector<8x256xf32> to vector<8xf32>
      %77 = vector.shape_cast %76 : vector<8xf32> to vector<8x1xf32>
      %78 = vector.broadcast %19 : vector<1x1xf32> to vector<8x1xf32>
      %79 = arith.addf %77, %78 : vector<8x1xf32>
      %c0_33 = arith.constant 0 : index
      %c0_34 = arith.constant 0 : index
      %c0_35 = arith.constant 0 : index
      %80 = vector.load %arg6[%c0_33, %c0_34, %c0_35] : memref<1x8x1xf32, #tpu.memory_space<vmem>>, vector<1x8x1xf32>
      %81 = vector.shape_cast %80 : vector<1x8x1xf32> to vector<8x1xf32>
      %82 = vector.shape_cast %79 : vector<8x1xf32> to vector<1x8x1xf32>
      tpu.vector_store %arg6[%c0_33, %c0_34, %c0_35], %82 {strides = array<i32>} : memref<1x8x1xf32, #tpu.memory_space<vmem>>, vector<1x8x1xf32>,
    } else {
    }
    return
  }
  func.func @transform_0(%arg0: i32, %arg1: i32) -> (i32, i32, i32) {
    %c0_i32 = arith.constant 0 : i32
    %c0_i32_0 = arith.constant 0 : i32
    return %arg0, %c0_i32, %arg1 : i32, i32, i32
  }
  func.func @transform_1(%arg0: i32, %arg1: i32) -> (i32, i32) {
    %c0_i32 = arith.constant 0 : i32
    %c0_i32_0 = arith.constant 0 : i32
    return %arg1, %c0_i32 : i32, i32
  }
  func.func @transform_2(%arg0: i32, %arg1: i32) -> (i32, i32) {
    %c0_i32 = arith.constant 0 : i32
    %c0_i32_0 = arith.constant 0 : i32
    %c0_i32_1 = arith.constant 0 : i32
    return %c0_i32, %c0_i32_0 : i32, i32
  }
  func.func @transform_3(%arg0: i32, %arg1: i32) -> (i32, i32) {
    %c0_i32 = arith.constant 0 : i32
    %c0_i32_0 = arith.constant 0 : i32
    %c0_i32_1 = arith.constant 0 : i32
    return %c0_i32, %c0_i32_0 : i32, i32
  }
  func.func @transform_4(%arg0: i32, %arg1: i32) -> (i32, i32, i32) {
    %c0_i32 = arith.constant 0 : i32
    %c0_i32_0 = arith.constant 0 : i32
    %c0_i32_1 = arith.constant 0 : i32
    return %arg0, %c0_i32, %c0_i32_0 : i32, i32, i32
  }
}

</mosaic_0001>

<llo_original>
// kernel: spm_forward.1
$region0: #{spm_forward.1}
  #allocation0 [shape = 'u32[]', space=smem, size = 0x4, offset = 0x4, fixed_abs, tag = 'smem constant byte address 0x4 - core index']
  #allocation1 [shape = 'u32[144,128]{1,0:T(1,128)}', space=vmem, size = 0x12000, scoped, tag = 'internal scratch']
  #allocation2 [shape = 'f32[8,256]{1,0:T(8,128)}', space=vmem, size = 0x2000, scoped, tag = 'scratch operand']
  %s0 = inlined_call_operand.vmem [shape: bf16[1,8,32], index: 0, kind: input, shape index: {}]
  %s1 = inlined_call_operand.vmem [shape: bf16[32,256], index: 1, kind: input, shape index: {}]
  %s2 = inlined_call_operand.hbm [shape: bf16[256,256], index: 2, kind: input, shape index: {}]
  %s3 = inlined_call_operand.vmem [shape: f32[6,256], index: 3, kind: input, shape index: {}]
  %s4 = inlined_call_operand.vmem [shape: f32[1,8,1], index: 4, kind: output, shape index: {}]
  %s5 = sld [smem:[#allocation0]]
  $region38: #{spm_forward.1} parent=0
    _
  %s7 = ssub.s32 1, %s5
  %s8 = scalar_select 0, %s7, %s5
  $region1: #{spm_forward.1} parent=0
    #allocation3 [shape = 'u8[131072]{0}', space=vmem, size = 0x20000, scoped, tag = 'input window, operand 2, single buffered']
    #allocation4 [shape = 's32[1]{0}', space=sflag, size = 0x4, scoped, tag = 'scoped memory for spm_forward.1']
    %9 = vsyncpa [#allocation4], 0
    // Predicated region
    $region2: #{spm_forward.1} parent=1 // pred_check
      _
    $region3: #{spm_forward.1} parent=1 // pred_check_branch
      %11 = sbr.rel (0) target = $region5
    $region4: #{spm_forward.1} parent=1 // pred_region
      _
    $region5: #{spm_forward.1} parent=1 // pred_fallthru
      _
    // Predicated region
    $region6: #{spm_forward.1} parent=1 // pred_check
      _
    $region7: #{spm_forward.1} parent=1 // pred_check_branch
      %13 = sbr.rel (0) target = $region9
    $region8: #{spm_forward.1} parent=1 // pred_region
      _
    $region9: #{spm_forward.1} parent=1 // pred_fallthru
      _
    // Predicated region
    $region10: #{spm_forward.1} parent=1 // pred_check
      _
    $region11: #{spm_forward.1} parent=1 // pred_check_branch
      %15 = sbr.rel (0) target = $region13
    $region12: #{spm_forward.1} parent=1 // pred_region
      %s17 = ssub.s32 4096, 4096
      %18 = vsyncadd [#allocation4], %s17
      %s19 = sshll.u32 [#allocation3], 4
      %s20 = int_to_ptr.vmem [resolvable:$true] %s19
      %25 = dma.hbm_to_vmem [thread:$0]  %s2, 4096, %s20, [#allocation4], 128, 128, 8
    $region13: #{spm_forward.1} parent=1 // pred_fallthru
      _
    // Predicated region
    $region14: #{spm_forward.1} parent=1 // pred_check
      _
    $region15: #{spm_forward.1} parent=1 // pred_check_branch
      %27 = sbr.rel (0) target = $region17
    $region16: #{spm_forward.1} parent=1 // pred_region
      _
    $region17: #{spm_forward.1} parent=1 // pred_fallthru
      _
    // Predicated region
    $region18: #{spm_forward.1} parent=1 // pred_check
      _
    $region19: #{spm_forward.1} parent=1 // pred_check_branch
      %29 = sbr.rel (0) target = $region21
    $region20: #{spm_forward.1} parent=1 // pred_region
      %30 = dma.done [#allocation4], 4096
    $region21: #{spm_forward.1} parent=1 // pred_fallthru
      _
    %p32 = scmp.eq.s32.totalorder 0, 0
    // Predicated region
    $region22: #{spm_forward.1} parent=1 // pred_check
      %p33 = pneg %p32
    $region23: #{spm_forward.1} parent=1 // pred_check_branch
      %35 = sbr.rel (%p33) target = $region25
    $region24: #{spm_forward.1} parent=1 // pred_region
      %36 = vst [vmem:[#allocation2] sm:$0xff] 0.0
      %37 = vst [vmem:[#allocation2 + $0x8] sm:$0xff] 0.0
    $region25: #{spm_forward.1} parent=1 // pred_fallthru
      _
    %v38 = vld [vmem:[#allocation2] sm:$0xff]
    %v39 = vld [vmem:[#allocation2 + $0x8] sm:$0xff]
    %v40 = vld [vmem:[%s0] sm:$0xf]
    %v41 = vld [vmem:[%s1] sm:$0xff]
    %v42 = vld [vmem:[%s1 + $0x8] sm:$0xff]
    %v43 = vld [vmem:[%s1 + $0x10] sm:$0xff]
    %v44 = vld [vmem:[%s1 + $0x18] sm:$0xff]
    %v49 = vunpack.c.l.b16 %v41
    %v50 = vunpack.c.h.b16 %v41
    %v51 = vunpack.c.l.b16 %v42
    %v52 = vunpack.c.h.b16 %v42
    %v53 = vunpack.c.l.b16 %v43
    %v54 = vunpack.c.h.b16 %v43
    %v55 = vunpack.c.l.b16 %v44
    %v56 = vunpack.c.h.b16 %v44
    %v57 = vpack.c.b16 %v51, %v49
    %v58 = vpack.c.b16 %v52, %v50
    %v59 = vpack.c.b16 %v55, %v53
    %v60 = vpack.c.b16 %v56, %v54
    %vm65 = vcmask 261120
    %v67 = vsel %vm65, %v40, 0
    %69 = vmatprep.subr.bf16.mxu0 %v58
    %70 = vmatpush1.bf16.msra.mxu0 %v57
    %71 = vmatprep.subr.bf16.mxu0 %v60
    %72 = vmatpush1.bf16.msra.mxu0 %v59
    %73 = vmatprep.subr.bf16.mxu0 0
    %74 = vmatpush1.bf16.msra.mxu0 0
    %75 = vmatprep.subr.bf16.mxu0 0
    %76 = vmatpush1.bf16.msra.mxu0 0
    %77 = vmatprep.subr.bf16.mxu0 0
    %78 = vmatpush1.bf16.msra.mxu0 0
    %79 = vmatprep.subr.bf16.mxu0 0
    %80 = vmatpush1.bf16.msra.mxu0 0
    %81 = vmatprep.subr.bf16.mxu0 0
    %82 = vmatpush1.bf16.msra.mxu0 0
    %83 = vmatprep.subr.bf16.mxu0 0
    %84 = vmatpush1.bf16.msra.mxu0 0
    %85 = vmatprep.subr.bf16.mxu0 0
    %86 = vmatpush1.bf16.msra.mxu0 0
    %87 = vmatprep.subr.bf16.mxu0 0
    %88 = vmatpush1.bf16.msra.mxu0 0
    %89 = vmatprep.subr.bf16.mxu0 0
    %90 = vmatpush1.bf16.msra.mxu0 0
    %91 = vmatprep.subr.bf16.mxu0 0
    %92 = vmatpush1.bf16.msra.mxu0 0
    %93 = vmatprep.subr.bf16.mxu0 0
    %94 = vmatpush1.bf16.msra.mxu0 0
    %95 = vmatprep.subr.bf16.mxu0 0
    %96 = vmatpush1.bf16.msra.mxu0 0
    %97 = vmatprep.subr.bf16.mxu0 0
    %98 = vmatpush1.bf16.msra.mxu0 0
    %99 = vmatprep.subr.bf16.mxu0 0
    %100 = vmatpush1.bf16.msra.mxu0 0
    %101 = vmatprep.mubr.bf16.mxu0 0
    %102 = vmatmul.mubr.bf16.gmra.mrb[0].mxu0 %v67
    %v103 = vpop.f32.mrb[0].mxu0
    %v104 = vadd.f32 0.0, %v103
    %v105 = vpop.f32.mrb[0].mxu0
    %v106 = vadd.f32 0.0, %v105
    %v107 = vpop.f32.mrb[0].mxu0
    %v108 = vpop.f32.mrb[0].mxu0
    %109 = vdwg.mxu0
    %v110 = vadd.f32 %v38, %v104
    %v111 = vadd.f32 %v39, %v106
    %112 = vst [vmem:[#allocation2] sm:$0xff] %v110
    %113 = vst [vmem:[#allocation2 + $0x8] sm:$0xff] %v111
    // Predicated region
    $region26: #{spm_forward.1} parent=1 // pred_check
      %p114 = pneg %p32
    $region27: #{spm_forward.1} parent=1 // pred_check_branch
      %116 = sbr.rel (%p114) target = $region29
    $region28: #{spm_forward.1} parent=1 // pred_region
      %v117 = vld [vmem:[%s3] sm:$0x3f]
      %v118 = vld [vmem:[%s3 + $0x8] sm:$0x3f]
      %v119 = vld [vmem:[#allocation2] sm:$0xff]
      %v120 = vld [vmem:[#allocation2 + $0x8] sm:$0xff]
      %v121 = vrot.slane %v119, 4
      %v122 = vadd.f32 %v119, %v121
      %v123 = vrot.slane %v122, 2
      %v124 = vadd.f32 %v122, %v123
      %v125 = vrot.slane %v124, 1
      %v126 = vadd.f32 %v124, %v125
      %v127 = vrot.slane %v120, 4
      %v128 = vadd.f32 %v120, %v127
      %v129 = vrot.slane %v128, 2
      %v130 = vadd.f32 %v128, %v129
      %v131 = vrot.slane %v130, 1
      %v132 = vadd.f32 %v130, %v131
      %v133 = vmul.f32 %v126, 0.125
      %v134 = vmul.f32 %v132, 0.125
      %v135 = vmul.f32 %v119, %v119
      %v136 = vmul.f32 %v120, %v120
      %v137 = vrot.slane %v135, 4
      %v138 = vadd.f32 %v135, %v137
      %v139 = vrot.slane %v138, 2
      %v140 = vadd.f32 %v138, %v139
      %v141 = vrot.slane %v140, 1
      %v142 = vadd.f32 %v140, %v141
      %v143 = vrot.slane %v136, 4
      %v144 = vadd.f32 %v136, %v143
      %v145 = vrot.slane %v144, 2
      %v146 = vadd.f32 %v144, %v145
      %v147 = vrot.slane %v146, 1
      %v148 = vadd.f32 %v146, %v147
      %v149 = vmul.f32 %v142, 0.125
      %v150 = vmul.f32 %v148, 0.125
      %v151 = vmul.f32 %v133, %v133
      %v152 = vmul.f32 %v134, %v134
      %v153 = vsub.f32 %v149, %v151
      %v154 = vsub.f32 %v150, %v152
      %v155 = vmax.f32 %v153, 0.0
      %v156 = vmax.f32 %v154, 0.0
      %v157 = vadd.f32 %v155, 1e-05
      %v158 = vadd.f32 %v156, 1e-05
      %v159 = vrsqrt.pop %v157
      %v160 = vrsqrt.pop %v158
      %v161 = vmul.f32 %v117, %v159
      %v162 = vmul.f32 %v118, %v160
      %v163 = vmul.f32 %v133, %v161
      %v164 = vmul.f32 %v134, %v162
      %v167 = vrot.slane %v163, 7
      %v168 = vrot.slane %v164, 7
      %v171 = vsub.f32 %v117, %v167
      %v172 = vsub.f32 %v118, %v168
      %v173 = vlaneseq
      %v174 = vshrl.u32 %v173, 7
      %v175 = vsub.s32 0, %v174
      %v176 = vrot.slane %v161, %v175
      %v177 = vlaneseq
      %v178 = vshrl.u32 %v177, 7
      %v179 = vsub.s32 0, %v178
      %v180 = vrot.slane %v162, %v179
      %v181 = vmul.f32 %v119, %v176
      %v182 = vmul.f32 %v120, %v180
      %v183 = vlaneseq
      %v184 = vshrl.u32 %v183, 7
      %v185 = vsub.s32 1, %v184
      %v186 = vrot.slane %v171, %v185
      %v187 = vlaneseq
      %v188 = vshrl.u32 %v187, 7
      %v189 = vsub.s32 1, %v188
      %v190 = vrot.slane %v172, %v189
      %v191 = vadd.f32 %v181, %v186
      %v192 = vadd.f32 %v182, %v190
      %v193 = vmax.f32 %v191, 0.0
      %v194 = vmax.f32 %v192, 0.0
      %v195 = vpack.c.bf16 %v193, %v193
      %v196 = vpack.c.bf16 %v194, %v194
      %v197 = vld [vmem:[#allocation3] sm:$0xff]
      %v198 = vld [vmem:[#allocation3 + $0x8] sm:$0xff]
      %v199 = vld [vmem:[#allocation3 + $0x10] sm:$0xff]
      %v200 = vld [vmem:[#allocation3 + $0x18] sm:$0xff]
      %v201 = vld [vmem:[#allocation3 + $0x20] sm:$0xff]
      %v202 = vld [vmem:[#allocation3 + $0x28] sm:$0xff]
      %v203 = vld [vmem:[#allocation3 + $0x30] sm:$0xff]
      %v204 = vld [vmem:[#allocation3 + $0x38] sm:$0xff]
      %v205 = vld [vmem:[#allocation3 + $0x40] sm:$0xff]
      %v206 = vld [vmem:[#allocation3 + $0x48] sm:$0xff]
      %v207 = vld [vmem:[#allocation3 + $0x50] sm:$0xff]
      %v208 = vld [vmem:[#allocation3 + $0x58] sm:$0xff]
      %v209 = vld [vmem:[#allocation3 + $0x60] sm:$0xff]
      %v210 = vld [vmem:[#allocation3 + $0x68] sm:$0xff]
      %v211 = vld [vmem:[#allocation3 + $0x70] sm:$0xff]
      %v212 = vld [vmem:[#allocation3 + $0x78] sm:$0xff]
      %v213 = vld [vmem:[#allocation3 + $0x80] sm:$0xff]
      %v214 = vld [vmem:[#allocation3 + $0x88] sm:$0xff]
      %v215 = vld [vmem:[#allocation3 + $0x90] sm:$0xff]
      %v216 = vld [vmem:[#allocation3 + $0x98] sm:$0xff]
      %v217 = vld [vmem:[#allocation3 + $0xa0] sm:$0xff]
      %v218 = vld [vmem:[#allocation3 + $0xa8] sm:$0xff]
      %v219 = vld [vmem:[#allocation3 + $0xb0] sm:$0xff]
      %v220 = vld [vmem:[#allocation3 + $0xb8] sm:$0xff]
      %v221 = vld [vmem:[#allocation3 + $0xc0] sm:$0xff]
      %v222 = vld [vmem:[#allocation3 + $0xc8] sm:$0xff]
      %v223 = vld [vmem:[#allocation3 + $0xd0] sm:$0xff]
      %v224 = vld [vmem:[#allocation3 + $0xd8] sm:$0xff]
      %v225 = vld [vmem:[#allocation3 + $0xe0] sm:$0xff]
      %v226 = vld [vmem:[#allocation3 + $0xe8] sm:$0xff]
      %v227 = vld [vmem:[#allocation3 + $0xf0] sm:$0xff]
      %v228 = vld [vmem:[#allocation3 + $0xf8] sm:$0xff]
      %v261 = vunpack.c.l.b16 %v197
      %v262 = vunpack.c.h.b16 %v197
      %v263 = vunpack.c.l.b16 %v198
      %v264 = vunpack.c.h.b16 %v198
      %v265 = vunpack.c.l.b16 %v199
      %v266 = vunpack.c.h.b16 %v199
      %v267 = vunpack.c.l.b16 %v200
      %v268 = vunpack.c.h.b16 %v200
      %v269 = vunpack.c.l.b16 %v201
      %v270 = vunpack.c.h.b16 %v201
      %v271 = vunpack.c.l.b16 %v202
      %v272 = vunpack.c.h.b16 %v202
      %v273 = vunpack.c.l.b16 %v203
      %v274 = vunpack.c.h.b16 %v203
      %v275 = vunpack.c.l.b16 %v204
      %v276 = vunpack.c.h.b16 %v204
      %v277 = vunpack.c.l.b16 %v205
      %v278 = vunpack.c.h.b16 %v205
      %v279 = vunpack.c.l.b16 %v206
      %v280 = vunpack.c.h.b16 %v206
      %v281 = vunpack.c.l.b16 %v207
      %v282 = vunpack.c.h.b16 %v207
      %v283 = vunpack.c.l.b16 %v208
      %v284 = vunpack.c.h.b16 %v208
      %v285 = vunpack.c.l.b16 %v209
      %v286 = vunpack.c.h.b16 %v209
      %v287 = vunpack.c.l.b16 %v210
      %v288 = vunpack.c.h.b16 %v210
      %v289 = vunpack.c.l.b16 %v211
      %v290 = vunpack.c.h.b16 %v211
      %v291 = vunpack.c.l.b16 %v212
      %v292 = vunpack.c.h.b16 %v212
      %v293 = vunpack.c.l.b16 %v213
      %v294 = vunpack.c.h.b16 %v213
      %v295 = vunpack.c.l.b16 %v214
      %v296 = vunpack.c.h.b16 %v214
      %v297 = vunpack.c.l.b16 %v215
      %v298 = vunpack.c.h.b16 %v215
      %v299 = vunpack.c.l.b16 %v216
      %v300 = vunpack.c.h.b16 %v216
      %v301 = vunpack.c.l.b16 %v217
      %v302 = vunpack.c.h.b16 %v217
      %v303 = vunpack.c.l.b16 %v218
      %v304 = vunpack.c.h.b16 %v218
      %v305 = vunpack.c.l.b16 %v219
      %v306 = vunpack.c.h.b16 %v219
      %v307 = vunpack.c.l.b16 %v220
      %v308 = vunpack.c.h.b16 %v220
      %v309 = vunpack.c.l.b16 %v221
      %v310 = vunpack.c.h.b16 %v221
      %v311 = vunpack.c.l.b16 %v222
      %v312 = vunpack.c.h.b16 %v222
      %v313 = vunpack.c.l.b16 %v223
      %v314 = vunpack.c.h.b16 %v223
      %v315 = vunpack.c.l.b16 %v224
      %v316 = vunpack.c.h.b16 %v224
      %v317 = vunpack.c.l.b16 %v225
      %v318 = vunpack.c.h.b16 %v225
      %v319 = vunpack.c.l.b16 %v226
      %v320 = vunpack.c.h.b16 %v226
      %v321 = vunpack.c.l.b16 %v227
      %v322 = vunpack.c.h.b16 %v227
      %v323 = vunpack.c.l.b16 %v228
      %v324 = vunpack.c.h.b16 %v228
      %v325 = vpack.c.b16 %v263, %v261
      %v326 = vpack.c.b16 %v264, %v262
      %v327 = vpack.c.b16 %v267, %v265
      %v328 = vpack.c.b16 %v268, %v266
      %v329 = vpack.c.b16 %v271, %v269
      %v330 = vpack.c.b16 %v272, %v270
      %v331 = vpack.c.b16 %v275, %v273
      %v332 = vpack.c.b16 %v276, %v274
      %v333 = vpack.c.b16 %v279, %v277
      %v334 = vpack.c.b16 %v280, %v278
      %v335 = vpack.c.b16 %v283, %v281
      %v336 = vpack.c.b16 %v284, %v282
      %v337 = vpack.c.b16 %v287, %v285
      %v338 = vpack.c.b16 %v288, %v286
      %v339 = vpack.c.b16 %v291, %v289
      %v340 = vpack.c.b16 %v292, %v290
      %v341 = vpack.c.b16 %v295, %v293
      %v342 = vpack.c.b16 %v296, %v294
      %v343 = vpack.c.b16 %v299, %v297
      %v344 = vpack.c.b16 %v300, %v298
      %v345 = vpack.c.b16 %v303, %v301
      %v346 = vpack.c.b16 %v304, %v302
      %v347 = vpack.c.b16 %v307, %v305
      %v348 = vpack.c.b16 %v308, %v306
      %v349 = vpack.c.b16 %v311, %v309
      %v350 = vpack.c.b16 %v312, %v310
      %v351 = vpack.c.b16 %v315, %v313
      %v352 = vpack.c.b16 %v316, %v314
      %v353 = vpack.c.b16 %v319, %v317
      %v354 = vpack.c.b16 %v320, %v318
      %v355 = vpack.c.b16 %v323, %v321
      %v356 = vpack.c.b16 %v324, %v322
      %389 = vmatprep.subr.bf16.mxu0 %v326
      %390 = vmatpush1.bf16.msra.mxu0 %v325
      %391 = vmatprep.subr.bf16.mxu0 %v328
      %392 = vmatpush1.bf16.msra.mxu0 %v327
      %393 = vmatprep.subr.bf16.mxu0 %v330
      %394 = vmatpush1.bf16.msra.mxu0 %v329
      %395 = vmatprep.subr.bf16.mxu0 %v332
      %396 = vmatpush1.bf16.msra.mxu0 %v331
      %397 = vmatprep.subr.bf16.mxu0 %v334
      %398 = vmatpush1.bf16.msra.mxu0 %v333
      %399 = vmatprep.subr.bf16.mxu0 %v336
      %400 = vmatpush1.bf16.msra.mxu0 %v335
      %401 = vmatprep.subr.bf16.mxu0 %v338
      %402 = vmatpush1.bf16.msra.mxu0 %v337
      %403 = vmatprep.subr.bf16.mxu0 %v340
      %404 = vmatpush1.bf16.msra.mxu0 %v339
      %405 = vmatprep.subr.bf16.mxu0 %v342
      %406 = vmatpush1.bf16.msra.mxu0 %v341
      %407 = vmatprep.subr.bf16.mxu0 %v344
      %408 = vmatpush1.bf16.msra.mxu0 %v343
      %409 = vmatprep.subr.bf16.mxu0 %v346
      %410 = vmatpush1.bf16.msra.mxu0 %v345
      %411 = vmatprep.subr.bf16.mxu0 %v348
      %412 = vmatpush1.bf16.msra.mxu0 %v347
      %413 = vmatprep.subr.bf16.mxu0 %v350
      %414 = vmatpush1.bf16.msra.mxu0 %v349
      %415 = vmatprep.subr.bf16.mxu0 %v352
      %416 = vmatpush1.bf16.msra.mxu0 %v351
      %417 = vmatprep.subr.bf16.mxu0 %v354
      %418 = vmatpush1.bf16.msra.mxu0 %v353
      %419 = vmatprep.subr.bf16.mxu0 %v356
      %420 = vmatpush1.bf16.msra.mxu0 %v355
      %421 = vmatprep.mubr.bf16.mxu0 %v196
      %422 = vmatmul.mubr.bf16.gmra.mrb[0].mxu0 %v195
      %v423 = vpop.f32.mrb[0].mxu0
      %v424 = vadd.f32 0.0, %v423
      %v425 = vpop.f32.mrb[0].mxu0
      %v426 = vadd.f32 0.0, %v425
      %v427 = vpop.f32.mrb[0].mxu0
      %v428 = vpop.f32.mrb[0].mxu0
      %429 = vdwg.mxu0
      %v430 = vrot.slane %v424, 4
      %v431 = vadd.f32 %v424, %v430
      %v432 = vrot.slane %v431, 2
      %v433 = vadd.f32 %v431, %v432
      %v434 = vrot.slane %v433, 1
      %v435 = vadd.f32 %v433, %v434
      %v436 = vrot.slane %v426, 4
      %v437 = vadd.f32 %v426, %v436
      %v438 = vrot.slane %v437, 2
      %v439 = vadd.f32 %v437, %v438
      %v440 = vrot.slane %v439, 1
      %v441 = vadd.f32 %v439, %v440
      %v442 = vmul.f32 %v435, 0.125
      %v443 = vmul.f32 %v441, 0.125
      %v444 = vmul.f32 %v424, %v424
      %v445 = vmul.f32 %v426, %v426
      %v446 = vrot.slane %v444, 4
      %v447 = vadd.f32 %v444, %v446
      %v448 = vrot.slane %v447, 2
      %v449 = vadd.f32 %v447, %v448
      %v450 = vrot.slane %v449, 1
      %v451 = vadd.f32 %v449, %v450
      %v452 = vrot.slane %v445, 4
      %v453 = vadd.f32 %v445, %v452
      %v454 = vrot.slane %v453, 2
      %v455 = vadd.f32 %v453, %v454
      %v456 = vrot.slane %v455, 1
      %v457 = vadd.f32 %v455, %v456
      %v458 = vmul.f32 %v451, 0.125
      %v459 = vmul.f32 %v457, 0.125
      %v460 = vmul.f32 %v442, %v442
      %v461 = vmul.f32 %v443, %v443
      %v462 = vsub.f32 %v458, %v460
      %v463 = vsub.f32 %v459, %v461
      %v464 = vmax.f32 %v462, 0.0
      %v465 = vmax.f32 %v463, 0.0
      %v466 = vadd.f32 %v464, 1e-05
      %v467 = vadd.f32 %v465, 1e-05
      %v468 = vrsqrt.pop %v466
      %v469 = vrsqrt.pop %v467
      %v470 = vmul.f32 %v117, %v468
      %v471 = vmul.f32 %v118, %v469
      %v472 = vmul.f32 %v442, %v470
      %v473 = vmul.f32 %v443, %v471
      %v476 = vrot.slane %v472, 7
      %v477 = vrot.slane %v473, 7
      %v480 = vsub.f32 %v117, %v476
      %v481 = vsub.f32 %v118, %v477
      %v482 = vlaneseq
      %v483 = vshrl.u32 %v482, 7
      %v484 = vsub.s32 2, %v483
      %v485 = vrot.slane %v470, %v484
      %v486 = vlaneseq
      %v487 = vshrl.u32 %v486, 7
      %v488 = vsub.s32 2, %v487
      %v489 = vrot.slane %v471, %v488
      %v490 = vmul.f32 %v424, %v485
      %v491 = vmul.f32 %v426, %v489
      %v492 = vlaneseq
      %v493 = vshrl.u32 %v492, 7
      %v494 = vsub.s32 3, %v493
      %v495 = vrot.slane %v480, %v494
      %v496 = vlaneseq
      %v497 = vshrl.u32 %v496, 7
      %v498 = vsub.s32 3, %v497
      %v499 = vrot.slane %v481, %v498
      %v500 = vadd.f32 %v490, %v495
      %v501 = vadd.f32 %v491, %v499
      %v502 = vmax.f32 %v500, 0.0
      %v503 = vmax.f32 %v501, 0.0
      %v504 = vlaneseq
      %v505 = vshrl.u32 %v504, 7
      %v506 = vsub.s32 4, %v505
      %v507 = vrot.slane %v117, %v506
      %v508 = vlaneseq
      %v509 = vshrl.u32 %v508, 7
      %v510 = vsub.s32 4, %v509
      %v511 = vrot.slane %v118, %v510
      %v512 = vmul.f32 %v502, %v507
      %v513 = vmul.f32 %v503, %v511
      %v514 = vadd.f32 %v512, %v513
      %515 = vadd.xlane.f32.xlu0 %v514
      %v516 = vpop.xlane.xlu0 %515
      %v517 = vlaneseq
      %v518 = vshrl.u32 %v517, 7
      %v519 = vsub.s32 5, %v518
      %v520 = vrot.slane %v117, %v519
      %v521 = vadd.f32 %v516, %v520
      %vm522 = vcmask 7168
      %523 = vst.msk [vmem:[%s4] sm:$0xff] %vm522, %v521
    $region29: #{spm_forward.1} parent=1 // pred_fallthru
      _
    // Predicated region
    $region30: #{spm_forward.1} parent=1 // pred_check
      _
    $region31: #{spm_forward.1} parent=1 // pred_check_branch
      %525 = sbr.rel (0) target = $region33
    $region32: #{spm_forward.1} parent=1 // pred_region
      _
    $region33: #{spm_forward.1} parent=1 // pred_fallthru
      _
    // Predicated region
    $region34: #{spm_forward.1} parent=1 // pred_check
      _
    $region35: #{spm_forward.1} parent=1 // pred_check_branch
      %527 = sbr.rel (0) target = $region37
    $region36: #{spm_forward.1} parent=1 // pred_region
      _
    $region37: #{spm_forward.1} parent=1 // pred_fallthru
      _
    %528 = vsyncpa [#allocation4], 1

</llo_original>
